<compile_context>
chip_gen: v5e
topology: v5e:2x2
jax: 0.10.0
libtpu: 0.0.40
codegen_flags: <defaults>
</compile_context>

<pallas_src>
import functools

import jax
import jax.numpy as jnp
from jax.experimental import pallas as pl
from jax.experimental.pallas import tpu as pltpu

LANE = 128                       # TPU lane width
SUBLANE = 8                      # TPU sublane width
_VMEM_LIMIT = 48 * 1024 * 1024   # headroom-safe on v7x (64 MiB physical VMEM)


def _round_up(x, m):
    return (x + m - 1) // m * m


# ---------------------------------------------------------------------------
# FUSED path: whole 2-layer GCN forward in a single VMEM-resident kernel
# ---------------------------------------------------------------------------
def _fused_gcn2_kernel(a_ref, x_ref, w1_ref, b1_ref, w2_ref, b2_ref, o_ref):
    bf = jnp.bfloat16
    # Layer 1: H = relu(A_hat @ (X @ W1) + b1)
    xw1 = jnp.dot(x_ref[...], w1_ref[...], preferred_element_type=jnp.float32)
    h = jnp.dot(a_ref[...], xw1.astype(bf), preferred_element_type=jnp.float32)
    h = jnp.maximum(h + b1_ref[...], 0.0).astype(bf)
    # Layer 2: out = A_hat @ (H @ W2) + b2
    hw2 = jnp.dot(h, w2_ref[...], preferred_element_type=jnp.float32)
    out = jnp.dot(a_ref[...], hw2.astype(bf), preferred_element_type=jnp.float32)
    o_ref[...] = (out + b2_ref[...]).astype(o_ref.dtype)


def _fused_forward(a_p, x_p, w1_p, b1_p, w2_p, b2_p):
    n_pad = a_p.shape[0]
    f_pad = x_p.shape[1]
    h_pad = w1_p.shape[1]
    c_pad = w2_p.shape[1]
    full = lambda shape: pl.BlockSpec(shape, lambda i: tuple(0 for _ in shape))
    return pl.pallas_call(
        _fused_gcn2_kernel,
        out_shape=jax.ShapeDtypeStruct((n_pad, c_pad), jnp.float32),
        grid_spec=pltpu.PrefetchScalarGridSpec(
            num_scalar_prefetch=0,
            grid=(1,),
            in_specs=[
                full((n_pad, n_pad)),
                full((n_pad, f_pad)),
                full((f_pad, h_pad)),
                full((1, h_pad)),
                full((h_pad, c_pad)),
                full((1, c_pad)),
            ],
            out_specs=full((n_pad, c_pad)),
        ),
        compiler_params=pltpu.CompilerParams(
            dimension_semantics=("arbitrary",),
            vmem_limit_bytes=_VMEM_LIMIT,
        ),
    )(a_p, x_p, w1_p, b1_p, w2_p, b2_p)


def _fused_fits_vmem(n_pad, f_pad, h_pad, c_pad, limit=_VMEM_LIMIT):
    """Rough (conservative) VMEM budget check for the fused path."""
    bf, f32 = 2, 4
    operands = (n_pad * n_pad + n_pad * f_pad + f_pad * h_pad + h_pad * c_pad) * bf
    operands += (h_pad + c_pad) * f32
    out_bytes = n_pad * c_pad * f32
    # f32 intermediates (xw1, h, hw2, out) + bf16 casts kept live in-flight.
    temps = n_pad * (2 * h_pad + 2 * c_pad) * f32 + n_pad * (h_pad + c_pad) * bf
    # Pipeline double-buffers operands/outputs even at grid=(1,): be conservative.
    return 2 * (operands + out_bytes) + temps < int(limit * 0.75)


# ---------------------------------------------------------------------------
# TILED path, kernel 1: feature projection  X @ W  (row-tiled, "parallel")
# ---------------------------------------------------------------------------
def _project_kernel(x_ref, w_ref, o_ref):
    o_ref[...] = jnp.dot(
        x_ref[...], w_ref[...], preferred_element_type=jnp.float32
    ).astype(o_ref.dtype)


def project(x, w, *, block_rows=256, out_dtype=jnp.bfloat16):
    n, k = x.shape
    f = w.shape[1]
    tm = min(block_rows, n)
    return pl.pallas_call(
        _project_kernel,
        out_shape=jax.ShapeDtypeStruct((n, f), out_dtype),
        grid_spec=pltpu.PrefetchScalarGridSpec(
            num_scalar_prefetch=0,
            grid=(n // tm,),
            in_specs=[
                pl.BlockSpec((tm, k), lambda i: (i, 0)),
                pl.BlockSpec((k, f), lambda i: (0, 0)),
            ],
            out_specs=pl.BlockSpec((tm, f), lambda i: (i, 0)),
        ),
        compiler_params=pltpu.CompilerParams(
            dimension_semantics=("parallel",),
            vmem_limit_bytes=_VMEM_LIMIT,
        ),
    )(x, w)


# ---------------------------------------------------------------------------
# TILED path, kernel 2: propagation  A_hat @ feats + bias (+ optional ReLU)
#           grid = (row tiles [parallel], K tiles [arbitrary, accumulator])
# ---------------------------------------------------------------------------
def _propagate_kernel(a_ref, f_ref, b_ref, o_ref, acc_ref, *, apply_relu):
    k = pl.program_id(1)

    @pl.when(k == 0)
    def _():
        acc_ref[...] = jnp.zeros_like(acc_ref)

    acc_ref[...] += jnp.dot(
        a_ref[...], f_ref[...], preferred_element_type=jnp.float32
    )

    @pl.when(k == pl.num_programs(1) - 1)
    def _():
        out = acc_ref[...] + b_ref[...]
        if apply_relu:
            out = jnp.maximum(out, 0.0)
        o_ref[...] = out.astype(o_ref.dtype)


def propagate(a_hat, feats, bias, *, apply_relu, block_rows=256, block_k=512,
              out_dtype=jnp.float32):
    n = a_hat.shape[0]
    f = feats.shape[1]
    tm = min(block_rows, n)
    tk = min(block_k, n)
    kernel = functools.partial(_propagate_kernel, apply_relu=apply_relu)
    return pl.pallas_call(
        kernel,
        out_shape=jax.ShapeDtypeStruct((n, f), out_dtype),
        grid_spec=pltpu.PrefetchScalarGridSpec(
            num_scalar_prefetch=0,
            grid=(n // tm, n // tk),
            in_specs=[
                pl.BlockSpec((tm, tk), lambda i, k: (i, k)),
                pl.BlockSpec((tk, f), lambda i, k: (k, 0)),
                pl.BlockSpec((1, f), lambda i, k: (0, 0)),
            ],
            out_specs=pl.BlockSpec((tm, f), lambda i, k: (i, 0)),
            scratch_shapes=[pltpu.VMEM((tm, f), jnp.float32)],
        ),
        compiler_params=pltpu.CompilerParams(
            dimension_semantics=("parallel", "arbitrary"),
            vmem_limit_bytes=_VMEM_LIMIT,
        ),
    )(a_hat, feats, bias)


# ---------------------------------------------------------------------------
# Wrapper: full TopicGraphModel forward (pads to lane/tile granularity)
# ---------------------------------------------------------------------------
def topic_graph_model_forward(a_hat, x, w1, b1, w2, b2,
                              *, mode="auto", block_rows=256, block_k=512):
    n, f_in = x.shape
    hidden = w1.shape[1]
    num_classes = w2.shape[1]
    bf = jnp.bfloat16

    f_pad = _round_up(f_in, SUBLANE)
    h_pad = _round_up(hidden, LANE)
    c_pad = _round_up(num_classes, LANE)

    fused_n_pad = _round_up(n, LANE)
    use_fused = (mode == "fused") or (
        mode == "auto" and _fused_fits_vmem(fused_n_pad, f_pad, h_pad, c_pad)
    )
    n_pad = fused_n_pad if use_fused else _round_up(n, max(block_rows, block_k))

    # Pad operands: node count to tile granularity, hidden/class dims to lanes.
    a_p = jnp.zeros((n_pad, n_pad), bf).at[:n, :n].set(a_hat.astype(bf))
    x_p = jnp.zeros((n_pad, f_pad), bf).at[:n, :f_in].set(x.astype(bf))
    w1_p = jnp.zeros((f_pad, h_pad), bf).at[:f_in, :hidden].set(w1.astype(bf))
    b1_p = jnp.zeros((1, h_pad), jnp.float32).at[:, :hidden].set(
        b1.reshape(1, -1).astype(jnp.float32))
    w2_p = jnp.zeros((h_pad, c_pad), bf).at[:hidden, :num_classes].set(w2.astype(bf))
    b2_p = jnp.zeros((1, c_pad), jnp.float32).at[:, :num_classes].set(
        b2.reshape(1, -1).astype(jnp.float32))

    if use_fused:
        out = _fused_forward(a_p, x_p, w1_p, b1_p, w2_p, b2_p)
    else:
        # Layer 1:  H = relu(A_hat @ (X @ W1) + b1)
        xw1 = project(x_p, w1_p, block_rows=block_rows, out_dtype=bf)
        h = propagate(a_p, xw1, b1_p, apply_relu=True,
                      block_rows=block_rows, block_k=block_k, out_dtype=bf)
        # Layer 2:  out = A_hat @ (H @ W2) + b2
        hw2 = project(h, w2_p, block_rows=block_rows, out_dtype=bf)
        out = propagate(a_p, hw2, b2_p, apply_relu=False,
                        block_rows=block_rows, block_k=block_k,
                        out_dtype=jnp.float32)

    return out[:n, :num_classes]


# ---------------------------------------------------------------------------
# Glue: dense normalized adjacency from edge_index (matches PyG gcn_norm:
# parallel edges scatter-add, self-loops consolidated to unit weight)
# ---------------------------------------------------------------------------
def build_normalized_adjacency(edge_index, num_nodes):
    src, dst = edge_index[0], edge_index[1]
    not_loop = (src != dst).astype(jnp.float32)
    a = jnp.zeros((num_nodes, num_nodes), jnp.float32)
    a = a.at[dst, src].add(not_loop)                 # scatter-add non-loop edges
    a = a + jnp.eye(num_nodes, dtype=jnp.float32)    # unit self-loop per node
    deg = a.sum(axis=1)
    d_inv_sqrt = jnp.where(deg > 0, jax.lax.rsqrt(deg), 0.0)
    return d_inv_sqrt[:, None] * a * d_inv_sqrt[None, :]


# ---------------------------------------------------------------------------
# Deterministic parameter init (glorot-style), matching GCNConv shapes
# ---------------------------------------------------------------------------
def init_params(key, in_channels, out_channels, num_classes):
    k1, k2 = jax.random.split(key)
    s1 = jnp.sqrt(6.0 / (in_channels + out_channels))
    s2 = jnp.sqrt(6.0 / (out_channels + num_classes))
    w1 = jax.random.uniform(k1, (in_channels, out_channels), jnp.float32, -s1, s1)
    w2 = jax.random.uniform(k2, (out_channels, num_classes), jnp.float32, -s2, s2)
    b1 = jnp.zeros((1, out_channels), jnp.float32)
    b2 = jnp.zeros((1, num_classes), jnp.float32)
    return w1, b1, w2, b2


# ---------------------------------------------------------------------------
# Pure-JAX f32 reference
# ---------------------------------------------------------------------------
def reference_forward(a_hat, x, w1, b1, w2, b2):
    h = jnp.maximum(a_hat @ (x @ w1) + b1, 0.0)
    return a_hat @ (h @ w2) + b2


if __name__ == "__main__":
    # Small synthetic problem: 16 nodes, 8 input features, 32 hidden, 4 classes.
    N, IN_CH, HIDDEN, NUM_CLASSES = 16, 8, 32, 4

    key = jax.random.PRNGKey(0)
    k_x, k_e, k_p = jax.random.split(key, 3)

    # Node features.
    x = jax.random.normal(k_x, (N, IN_CH), dtype=jnp.float32)

    # Deterministic edge_index: a ring plus random extra (directed) edges.
    ring_src = jnp.arange(N, dtype=jnp.int32)
    ring_dst = (ring_src + 1) % N
    extra = jax.random.randint(k_e, (2, 24), 0, N, dtype=jnp.int32)
    edge_index = jnp.stack(
        [jnp.concatenate([ring_src, extra[0]]),
         jnp.concatenate([ring_dst, extra[1]])],
        axis=0,
    )

    a_hat = build_normalized_adjacency(edge_index, N)
    w1, b1, w2, b2 = init_params(k_p, IN_CH, HIDDEN, NUM_CLASSES)

    ref = reference_forward(a_hat, x, w1, b1, w2, b2)

    # Fused (single-kernel, VMEM-resident) path — default for this size.
    out_fused = jax.block_until_ready(
        topic_graph_model_forward(a_hat, x, w1, b1, w2, b2, mode="auto"))
    assert out_fused.shape == (N, NUM_CLASSES)
    # bf16 operands / f32 accumulation vs f32 reference -> loosened tolerance.
    assert jnp.allclose(out_fused, ref, atol=5e-2, rtol=5e-2)

    # Tiled (streaming) path — used automatically for graphs too big for VMEM;
    # exercised here explicitly to keep it verified.
    out_tiled = jax.block_until_ready(
        topic_graph_model_forward(a_hat, x, w1, b1, w2, b2, mode="tiled",
                                  block_rows=128, block_k=128))
    assert out_tiled.shape == (N, NUM_CLASSES)
    assert jnp.allclose(out_tiled, ref, atol=5e-2, rtol=5e-2)

    print("KERNEL_OK")
</pallas_src>

<mosaic_0001>
module attributes {stable_mosaic.version = 11 : i64} {
  func.func @_fused_gcn2_kernel(%arg0: i32, %arg1: memref<128x128xbf16, #tpu.memory_space<vmem>>, %arg2: memref<128x8xbf16, #tpu.memory_space<vmem>>, %arg3: memref<8x128xbf16, #tpu.memory_space<vmem>>, %arg4: memref<1x128xf32, #tpu.memory_space<vmem>>, %arg5: memref<128x128xbf16, #tpu.memory_space<vmem>>, %arg6: memref<1x128xf32, #tpu.memory_space<vmem>>, %arg7: memref<128x128xf32, #tpu.memory_space<vmem>>) attributes {dimension_semantics = [#tpu.dimension_semantics<arbitrary>], iteration_bounds = array<i64: 1>, scalar_prefetch = 0 : i64, scratch_operands = 0 : i64, tpu.core_type = #tpu.core_type<tc>, window_params = [{pipeline_mode = #tpu.pipeline_mode<synchronous>, transform_indices = @transform_0, window_bounds = array<i64: 128, 128>}, {pipeline_mode = #tpu.pipeline_mode<synchronous>, transform_indices = @transform_1, window_bounds = array<i64: 128, 8>}, {pipeline_mode = #tpu.pipeline_mode<synchronous>, transform_indices = @transform_2, window_bounds = array<i64: 8, 128>}, {pipeline_mode = #tpu.pipeline_mode<synchronous>, transform_indices = @transform_3, window_bounds = array<i64: 1, 128>}, {pipeline_mode = #tpu.pipeline_mode<synchronous>, transform_indices = @transform_4, window_bounds = array<i64: 128, 128>}, {pipeline_mode = #tpu.pipeline_mode<synchronous>, transform_indices = @transform_5, window_bounds = array<i64: 1, 128>}, {pipeline_mode = #tpu.pipeline_mode<synchronous>, transform_indices = @transform_6, window_bounds = array<i64: 128, 128>}]} {
    %c0 = arith.constant 0 : index
    %c0_0 = arith.constant 0 : index
    %0 = vector.load %arg2[%c0, %c0_0] : memref<128x8xbf16, #tpu.memory_space<vmem>>, vector<128x8xbf16>
    %c0_1 = arith.constant 0 : index
    %c0_2 = arith.constant 0 : index
    %1 = vector.load %arg3[%c0_1, %c0_2] : memref<8x128xbf16, #tpu.memory_space<vmem>>, vector<8x128xbf16>
    %cst = arith.constant dense<0.000000e+00> : vector<128x128xf32>
    %2 = tpu.matmul %0, %1, %cst {dimension_numbers = #tpu.dot_dimension_numbers<[1], [0], [0], [1], [0, 0, 1, 1], [], []>} : vector<128x8xbf16>, vector<8x128xbf16>, vector<128x128xf32> -> vector<128x128xf32>
    %c0_3 = arith.constant 0 : index
    %c0_4 = arith.constant 0 : index
    %3 = vector.load %arg1[%c0_3, %c0_4] : memref<128x128xbf16, #tpu.memory_space<vmem>>, vector<128x128xbf16>
    %4 = arith.truncf %2 : vector<128x128xf32> to vector<128x128xbf16>
    %cst_5 = arith.constant dense<0.000000e+00> : vector<128x128xf32>
    %5 = tpu.matmul %3, %4, %cst_5 {dimension_numbers = #tpu.dot_dimension_numbers<[1], [0], [0], [1], [0, 0, 1, 1], [], []>} : vector<128x128xbf16>, vector<128x128xbf16>, vector<128x128xf32> -> vector<128x128xf32>
    %c0_6 = arith.constant 0 : index
    %c0_7 = arith.constant 0 : index
    %6 = vector.load %arg4[%c0_6, %c0_7] : memref<1x128xf32, #tpu.memory_space<vmem>>, vector<1x128xf32>
    %7 = vector.broadcast %6 : vector<1x128xf32> to vector<128x128xf32>
    %8 = arith.addf %5, %7 : vector<128x128xf32>
    %cst_8 = arith.constant 0.000000e+00 : f32
    %9 = vector.broadcast %cst_8 : f32 to vector<128x128xf32>
    %10 = arith.maximumf %8, %9 : vector<128x128xf32>
    %11 = arith.truncf %10 : vector<128x128xf32> to vector<128x128xbf16>
    %c0_9 = arith.constant 0 : index
    %c0_10 = arith.constant 0 : index
    %12 = vector.load %arg5[%c0_9, %c0_10] : memref<128x128xbf16, #tpu.memory_space<vmem>>, vector<128x128xbf16>
    %cst_11 = arith.constant dense<0.000000e+00> : vector<128x128xf32>
    %13 = tpu.matmul %11, %12, %cst_11 {dimension_numbers = #tpu.dot_dimension_numbers<[1], [0], [0], [1], [0, 0, 1, 1], [], []>} : vector<128x128xbf16>, vector<128x128xbf16>, vector<128x128xf32> -> vector<128x128xf32>
    %c0_12 = arith.constant 0 : index
    %c0_13 = arith.constant 0 : index
    %14 = vector.load %arg1[%c0_12, %c0_13] : memref<128x128xbf16, #tpu.memory_space<vmem>>, vector<128x128xbf16>
    %15 = arith.truncf %13 : vector<128x128xf32> to vector<128x128xbf16>
    %cst_14 = arith.constant dense<0.000000e+00> : vector<128x128xf32>
    %16 = tpu.matmul %14, %15, %cst_14 {dimension_numbers = #tpu.dot_dimension_numbers<[1], [0], [0], [1], [0, 0, 1, 1], [], []>} : vector<128x128xbf16>, vector<128x128xbf16>, vector<128x128xf32> -> vector<128x128xf32>
    %c0_15 = arith.constant 0 : index
    %c0_16 = arith.constant 0 : index
    %17 = vector.load %arg6[%c0_15, %c0_16] : memref<1x128xf32, #tpu.memory_space<vmem>>, vector<1x128xf32>
    %18 = vector.broadcast %17 : vector<1x128xf32> to vector<128x128xf32>
    %19 = arith.addf %16, %18 : vector<128x128xf32>
    %c0_17 = arith.constant 0 : index
    %c0_18 = arith.constant 0 : index
    %20 = vector.load %arg7[%c0_17, %c0_18] : memref<128x128xf32, #tpu.memory_space<vmem>>, vector<128x128xf32>
    tpu.vector_store %arg7[%c0_17, %c0_18], %19 {strides = array<i32>} : memref<128x128xf32, #tpu.memory_space<vmem>>, vector<128x128xf32>,
    return
  }
  func.func @transform_0(%arg0: i32) -> (i32, i32) {
    %c0_i32 = arith.constant 0 : i32
    %c0_i32_0 = arith.constant 0 : i32
    %c0_i32_1 = arith.constant 0 : i32
    return %c0_i32, %c0_i32_0 : i32, i32
  }
  func.func @transform_1(%arg0: i32) -> (i32, i32) {
    %c0_i32 = arith.constant 0 : i32
    %c0_i32_0 = arith.constant 0 : i32
    %c0_i32_1 = arith.constant 0 : i32
    return %c0_i32, %c0_i32_0 : i32, i32
  }
  func.func @transform_2(%arg0: i32) -> (i32, i32) {
    %c0_i32 = arith.constant 0 : i32
    %c0_i32_0 = arith.constant 0 : i32
    %c0_i32_1 = arith.constant 0 : i32
    return %c0_i32, %c0_i32_0 : i32, i32
  }
  func.func @transform_3(%arg0: i32) -> (i32, i32) {
    %c0_i32 = arith.constant 0 : i32
    %c0_i32_0 = arith.constant 0 : i32
    %c0_i32_1 = arith.constant 0 : i32
    return %c0_i32, %c0_i32_0 : i32, i32
  }
  func.func @transform_4(%arg0: i32) -> (i32, i32) {
    %c0_i32 = arith.constant 0 : i32
    %c0_i32_0 = arith.constant 0 : i32
    %c0_i32_1 = arith.constant 0 : i32
    return %c0_i32, %c0_i32_0 : i32, i32
  }
  func.func @transform_5(%arg0: i32) -> (i32, i32) {
    %c0_i32 = arith.constant 0 : i32
    %c0_i32_0 = arith.constant 0 : i32
    %c0_i32_1 = arith.constant 0 : i32
    return %c0_i32, %c0_i32_0 : i32, i32
  }
  func.func @transform_6(%arg0: i32) -> (i32, i32) {
    %c0_i32 = arith.constant 0 : i32
    %c0_i32_0 = arith.constant 0 : i32
    %c0_i32_1 = arith.constant 0 : i32
    return %c0_i32, %c0_i32_0 : i32, i32
  }
}

</mosaic_0001>

<llo_original>
// kernel: tpu_custom_call.1
$region0: #{tpu_custom_call.1}
  #allocation0 [shape = 'u32[]', space=smem, size = 0x4, offset = 0x4, fixed_abs, tag = 'smem constant byte address 0x4 - core index']
  #allocation1 [shape = 'u32[72,128]{1,0:T(1,128)}', space=vmem, size = 0x9000, scoped, tag = 'internal scratch']
  %s0 = inlined_call_operand.vmem [shape: bf16[128,128], index: 0, kind: input, shape index: {}]
  %s1 = inlined_call_operand.vmem [shape: bf16[128,8], index: 1, kind: input, shape index: {}]
  %s2 = inlined_call_operand.vmem [shape: bf16[8,128], index: 2, kind: input, shape index: {}]
  %s3 = inlined_call_operand.vmem [shape: f32[1,128], index: 3, kind: input, shape index: {}]
  %s4 = inlined_call_operand.hbm [shape: bf16[128,128], index: 4, kind: input, shape index: {}]
  %s5 = inlined_call_operand.vmem [shape: f32[1,128], index: 5, kind: input, shape index: {}]
  %s6 = inlined_call_operand.hbm [shape: f32[128,128], index: 6, kind: output, shape index: {}]
  %s7 = sld [smem:[#allocation0]]
  $region38: #{tpu_custom_call.1} parent=0
    _
  %s9 = ssub.s32 1, %s7
  %s10 = scalar_select 0, %s9, %s7
  $region1: #{tpu_custom_call.1} parent=0
    #allocation2 [shape = 'u8[32768]{0}', space=vmem, size = 0x8000, scoped, tag = 'input window, operand 4, single buffered']
    #allocation3 [shape = 's32[1]{0}', space=sflag, size = 0x4, scoped, tag = 'scoped memory for tpu_custom_call.1']
    #allocation4 [shape = 's32[1]{0}', space=sflag, size = 0x4, scoped, tag = 'scoped memory for tpu_custom_call.1']
    #allocation5 [shape = 'u8[65536]{0}', space=vmem, size = 0x10000, scoped, tag = 'output window, operand 0, single buffered']
    %11 = vsyncpa [#allocation3], 0
    %12 = vsyncpa [#allocation4], 0
    // Predicated region
    $region2: #{tpu_custom_call.1} parent=1 // pred_check
      _
    $region3: #{tpu_custom_call.1} parent=1 // pred_check_branch
      %14 = sbr.rel (0) target = $region5
    $region4: #{tpu_custom_call.1} parent=1 // pred_region
      _
    $region5: #{tpu_custom_call.1} parent=1 // pred_fallthru
      _
    // Predicated region
    $region6: #{tpu_custom_call.1} parent=1 // pred_check
      _
    $region7: #{tpu_custom_call.1} parent=1 // pred_check_branch
      %16 = sbr.rel (0) target = $region9
    $region8: #{tpu_custom_call.1} parent=1 // pred_region
      _
    $region9: #{tpu_custom_call.1} parent=1 // pred_fallthru
      _
    // Predicated region
    $region10: #{tpu_custom_call.1} parent=1 // pred_check
      _
    $region11: #{tpu_custom_call.1} parent=1 // pred_check_branch
      %18 = sbr.rel (0) target = $region13
    $region12: #{tpu_custom_call.1} parent=1 // pred_region
      _
    $region13: #{tpu_custom_call.1} parent=1 // pred_fallthru
      _
    // Predicated region
    $region14: #{tpu_custom_call.1} parent=1 // pred_check
      _
    $region15: #{tpu_custom_call.1} parent=1 // pred_check_branch
      %20 = sbr.rel (0) target = $region17
    $region16: #{tpu_custom_call.1} parent=1 // pred_region
      _
    $region17: #{tpu_custom_call.1} parent=1 // pred_fallthru
      _
    // Predicated region
    $region18: #{tpu_custom_call.1} parent=1 // pred_check
      _
    $region19: #{tpu_custom_call.1} parent=1 // pred_check_branch
      %22 = sbr.rel (0) target = $region21
    $region20: #{tpu_custom_call.1} parent=1 // pred_region
      %24 = vsyncadd [#allocation3], 0
      %s25 = sshll.u32 %s4, 4
      %s26 = int_to_ptr.hbm [resolvable:$true] %s25
      %s27 = sshll.u32 [#allocation2], 4
      %s28 = int_to_ptr.vmem [resolvable:$true] %s27
      %33 = dma.hbm_to_vmem [thread:$0]  %s26, 1024, %s28, [#allocation3], 64, 64, 4
    $region21: #{tpu_custom_call.1} parent=1 // pred_fallthru
      _
    // Predicated region
    $region22: #{tpu_custom_call.1} parent=1 // pred_check
      _
    $region23: #{tpu_custom_call.1} parent=1 // pred_check_branch
      %35 = sbr.rel (0) target = $region25
    $region24: #{tpu_custom_call.1} parent=1 // pred_region
      _
    $region25: #{tpu_custom_call.1} parent=1 // pred_fallthru
      _
    // Predicated region
    $region26: #{tpu_custom_call.1} parent=1 // pred_check
      _
    $region27: #{tpu_custom_call.1} parent=1 // pred_check_branch
      %37 = sbr.rel (0) target = $region29
    $region28: #{tpu_custom_call.1} parent=1 // pred_region
      %39 = dma.done [#allocation3], 1024
    $region29: #{tpu_custom_call.1} parent=1 // pred_fallthru
      _
    %v41 = vld [vmem:[%s1] sm:$0xf]
    %v42 = vld [vmem:[%s1 + $0x4] sm:$0xf]
    %v43 = vld [vmem:[%s1 + $0x8] sm:$0xf]
    %v44 = vld [vmem:[%s1 + $0xc] sm:$0xf]
    %v45 = vld [vmem:[%s1 + $0x10] sm:$0xf]
    %v46 = vld [vmem:[%s1 + $0x14] sm:$0xf]
    %v47 = vld [vmem:[%s1 + $0x18] sm:$0xf]
    %v48 = vld [vmem:[%s1 + $0x1c] sm:$0xf]
    %v49 = vld [vmem:[%s1 + $0x20] sm:$0xf]
    %v50 = vld [vmem:[%s1 + $0x24] sm:$0xf]
    %v51 = vld [vmem:[%s1 + $0x28] sm:$0xf]
    %v52 = vld [vmem:[%s1 + $0x2c] sm:$0xf]
    %v53 = vld [vmem:[%s1 + $0x30] sm:$0xf]
    %v54 = vld [vmem:[%s1 + $0x34] sm:$0xf]
    %v55 = vld [vmem:[%s1 + $0x38] sm:$0xf]
    %v56 = vld [vmem:[%s1 + $0x3c] sm:$0xf]
    %v57 = vld [vmem:[%s2] sm:$0xf]
    %v74 = vunpack.c.l.b16 %v41
    %v75 = vunpack.c.l.b16 %v42
    %v76 = vunpack.c.l.b16 %v43
    %v77 = vunpack.c.l.b16 %v44
    %v78 = vunpack.c.l.b16 %v45
    %v79 = vunpack.c.l.b16 %v46
    %v80 = vunpack.c.l.b16 %v47
    %v81 = vunpack.c.l.b16 %v48
    %v82 = vunpack.c.l.b16 %v49
    %v83 = vunpack.c.l.b16 %v50
    %v84 = vunpack.c.l.b16 %v51
    %v85 = vunpack.c.l.b16 %v52
    %v86 = vunpack.c.l.b16 %v53
    %v87 = vunpack.c.l.b16 %v54
    %v88 = vunpack.c.l.b16 %v55
    %v89 = vunpack.c.l.b16 %v56
    %v90 = vpack.c.b16 %v75, %v74
    %v91 = vpack.c.b16 %v77, %v76
    %v92 = vpack.c.b16 %v79, %v78
    %v93 = vpack.c.b16 %v81, %v80
    %v94 = vpack.c.b16 %v83, %v82
    %v95 = vpack.c.b16 %v85, %v84
    %v96 = vpack.c.b16 %v87, %v86
    %v97 = vpack.c.b16 %v89, %v88
    %vm98 = vcmask 64512
    %v100 = vsel %vm98, %v90, 0
    %v103 = vsel %vm98, %v91, 0
    %v106 = vsel %vm98, %v92, 0
    %v109 = vsel %vm98, %v93, 0
    %v112 = vsel %vm98, %v94, 0
    %v115 = vsel %vm98, %v95, 0
    %v118 = vsel %vm98, %v96, 0
    %v121 = vsel %vm98, %v97, 0
    %vm123 = vcmask 1043456
    %v125 = vsel %vm123, %v57, 0
    %127 = vmatpush.bf16.msra.mxu0 0
    %128 = vmatpush.bf16.msra.mxu0 0
    %129 = vmatpush.bf16.msra.mxu0 0
    %130 = vmatpush.bf16.msra.mxu0 0
    %131 = vmatpush.bf16.msra.mxu0 0
    %132 = vmatpush.bf16.msra.mxu0 0
    %133 = vmatpush.bf16.msra.mxu0 0
    %134 = vmatpush.bf16.msra.mxu0 %v125
    %135 = vmatmul.bf16.gmra.mxu0 %v100
    %v136 = vpop.f32.mrf.mxu0
    %v137 = vadd.f32 0.0, %v136
    %v138 = vpop.f32.mrf.mxu0
    %v139 = vadd.f32 0.0, %v138
    %140 = vmatmul.bf16.gmra.mxu0 %v103
    %v141 = vpop.f32.mrf.mxu0
    %v142 = vadd.f32 0.0, %v141
    %v143 = vpop.f32.mrf.mxu0
    %v144 = vadd.f32 0.0, %v143
    %145 = vmatmul.bf16.gmra.mxu0 %v106
    %v146 = vpop.f32.mrf.mxu0
    %v147 = vadd.f32 0.0, %v146
    %v148 = vpop.f32.mrf.mxu0
    %v149 = vadd.f32 0.0, %v148
    %150 = vmatmul.bf16.gmra.mxu0 %v109
    %v151 = vpop.f32.mrf.mxu0
    %v152 = vadd.f32 0.0, %v151
    %v153 = vpop.f32.mrf.mxu0
    %v154 = vadd.f32 0.0, %v153
    %155 = vmatmul.bf16.gmra.mxu0 %v112
    %v156 = vpop.f32.mrf.mxu0
    %v157 = vadd.f32 0.0, %v156
    %v158 = vpop.f32.mrf.mxu0
    %v159 = vadd.f32 0.0, %v158
    %160 = vmatmul.bf16.gmra.mxu0 %v115
    %v161 = vpop.f32.mrf.mxu0
    %v162 = vadd.f32 0.0, %v161
    %v163 = vpop.f32.mrf.mxu0
    %v164 = vadd.f32 0.0, %v163
    %165 = vmatmul.bf16.gmra.mxu0 %v118
    %v166 = vpop.f32.mrf.mxu0
    %v167 = vadd.f32 0.0, %v166
    %v168 = vpop.f32.mrf.mxu0
    %v169 = vadd.f32 0.0, %v168
    %170 = vmatmul.bf16.gmra.mxu0 %v121
    %v171 = vpop.f32.mrf.mxu0
    %v172 = vadd.f32 0.0, %v171
    %v173 = vpop.f32.mrf.mxu0
    %v174 = vadd.f32 0.0, %v173
    %175 = vdwg.mxu0
    %v176 = vld [vmem:[%s0] sm:$0xf]
    %v177 = vld [vmem:[%s0 + $0x4] sm:$0xf]
    %v178 = vld [vmem:[%s0 + $0x8] sm:$0xf]
    %v179 = vld [vmem:[%s0 + $0xc] sm:$0xf]
    %v180 = vld [vmem:[%s0 + $0x10] sm:$0xf]
    %v181 = vld [vmem:[%s0 + $0x14] sm:$0xf]
    %v182 = vld [vmem:[%s0 + $0x18] sm:$0xf]
    %v183 = vld [vmem:[%s0 + $0x1c] sm:$0xf]
    %v184 = vld [vmem:[%s0 + $0x20] sm:$0xf]
    %v185 = vld [vmem:[%s0 + $0x24] sm:$0xf]
    %v186 = vld [vmem:[%s0 + $0x28] sm:$0xf]
    %v187 = vld [vmem:[%s0 + $0x2c] sm:$0xf]
    %v188 = vld [vmem:[%s0 + $0x30] sm:$0xf]
    %v189 = vld [vmem:[%s0 + $0x34] sm:$0xf]
    %v190 = vld [vmem:[%s0 + $0x38] sm:$0xf]
    %v191 = vld [vmem:[%s0 + $0x3c] sm:$0xf]
    %v192 = vpack.c.bf16 %v139, %v137
    %v193 = vpack.c.bf16 %v144, %v142
    %v194 = vpack.c.bf16 %v149, %v147
    %v195 = vpack.c.bf16 %v154, %v152
    %v196 = vpack.c.bf16 %v159, %v157
    %v197 = vpack.c.bf16 %v164, %v162
    %v198 = vpack.c.bf16 %v169, %v167
    %v199 = vpack.c.bf16 %v174, %v172
    %v200 = vld [vmem:[%s3] sm:$0x1]
    %v202 = vperm.slane %v200, 0
    %v220 = vunpack.c.l.b16 %v176
    %v221 = vunpack.c.l.b16 %v177
    %v222 = vunpack.c.l.b16 %v178
    %v223 = vunpack.c.l.b16 %v179
    %v224 = vunpack.c.l.b16 %v180
    %v225 = vunpack.c.l.b16 %v181
    %v226 = vunpack.c.l.b16 %v182
    %v227 = vunpack.c.l.b16 %v183
    %v228 = vunpack.c.l.b16 %v184
    %v229 = vunpack.c.l.b16 %v185
    %v230 = vunpack.c.l.b16 %v186
    %v231 = vunpack.c.l.b16 %v187
    %v232 = vunpack.c.l.b16 %v188
    %v233 = vunpack.c.l.b16 %v189
    %v234 = vunpack.c.l.b16 %v190
    %v235 = vunpack.c.l.b16 %v191
    %v236 = vpack.c.b16 %v221, %v220
    %v237 = vpack.c.b16 %v223, %v222
    %v238 = vpack.c.b16 %v225, %v224
    %v239 = vpack.c.b16 %v227, %v226
    %v240 = vpack.c.b16 %v229, %v228
    %v241 = vpack.c.b16 %v231, %v230
    %v242 = vpack.c.b16 %v233, %v232
    %v243 = vpack.c.b16 %v235, %v234
    %252 = vmatpush.bf16.msra.mxu0 %v199
    %253 = vmatpush.bf16.msra.mxu0 %v198
    %254 = vmatpush.bf16.msra.mxu0 %v197
    %255 = vmatpush.bf16.msra.mxu0 %v196
    %256 = vmatpush.bf16.msra.mxu0 %v195
    %257 = vmatpush.bf16.msra.mxu0 %v194
    %258 = vmatpush.bf16.msra.mxu0 %v193
    %259 = vmatpush.bf16.msra.mxu0 %v192
    %260 = vmatmul.bf16.gmra.mxu0 %v236
    %v261 = vpop.f32.mrf.mxu0
    %v262 = vadd.f32 %v202, %v261
    %v263 = vpop.f32.mrf.mxu0
    %v264 = vadd.f32 %v202, %v263
    %265 = vmatmul.bf16.gmra.mxu0 %v237
    %v266 = vpop.f32.mrf.mxu0
    %v267 = vadd.f32 %v202, %v266
    %v268 = vpop.f32.mrf.mxu0
    %v269 = vadd.f32 %v202, %v268
    %270 = vmatmul.bf16.gmra.mxu0 %v238
    %v271 = vpop.f32.mrf.mxu0
    %v272 = vadd.f32 %v202, %v271
    %v273 = vpop.f32.mrf.mxu0
    %v274 = vadd.f32 %v202, %v273
    %275 = vmatmul.bf16.gmra.mxu0 %v239
    %v276 = vpop.f32.mrf.mxu0
    %v277 = vadd.f32 %v202, %v276
    %v278 = vpop.f32.mrf.mxu0
    %v279 = vadd.f32 %v202, %v278
    %280 = vmatmul.bf16.gmra.mxu0 %v240
    %v281 = vpop.f32.mrf.mxu0
    %v282 = vadd.f32 %v202, %v281
    %v283 = vpop.f32.mrf.mxu0
    %v284 = vadd.f32 %v202, %v283
    %285 = vmatmul.bf16.gmra.mxu0 %v241
    %v286 = vpop.f32.mrf.mxu0
    %v287 = vadd.f32 %v202, %v286
    %v288 = vpop.f32.mrf.mxu0
    %v289 = vadd.f32 %v202, %v288
    %290 = vmatmul.bf16.gmra.mxu0 %v242
    %v291 = vpop.f32.mrf.mxu0
    %v292 = vadd.f32 %v202, %v291
    %v293 = vpop.f32.mrf.mxu0
    %v294 = vadd.f32 %v202, %v293
    %295 = vmatmul.bf16.gmra.mxu0 %v243
    %v296 = vpop.f32.mrf.mxu0
    %v297 = vadd.f32 %v202, %v296
    %v298 = vpop.f32.mrf.mxu0
    %v299 = vadd.f32 %v202, %v298
    %300 = vdwg.mxu0
    %v301 = vmax.f32 %v262, 0.0
    %v302 = vmax.f32 %v264, 0.0
    %v303 = vmax.f32 %v267, 0.0
    %v304 = vmax.f32 %v269, 0.0
    %v305 = vmax.f32 %v272, 0.0
    %v306 = vmax.f32 %v274, 0.0
    %v307 = vmax.f32 %v277, 0.0
    %v308 = vmax.f32 %v279, 0.0
    %v309 = vmax.f32 %v282, 0.0
    %v310 = vmax.f32 %v284, 0.0
    %v311 = vmax.f32 %v287, 0.0
    %v312 = vmax.f32 %v289, 0.0
    %v313 = vmax.f32 %v292, 0.0
    %v314 = vmax.f32 %v294, 0.0
    %v315 = vmax.f32 %v297, 0.0
    %v316 = vmax.f32 %v299, 0.0
    %v317 = vpack.c.bf16 %v302, %v301
    %v318 = vpack.c.bf16 %v304, %v303
    %v319 = vpack.c.bf16 %v306, %v305
    %v320 = vpack.c.bf16 %v308, %v307
    %v321 = vpack.c.bf16 %v310, %v309
    %v322 = vpack.c.bf16 %v312, %v311
    %v323 = vpack.c.bf16 %v314, %v313
    %v324 = vpack.c.bf16 %v316, %v315
    %v325 = vld [vmem:[#allocation2] sm:$0xf]
    %v326 = vld [vmem:[#allocation2 + $0x4] sm:$0xf]
    %v327 = vld [vmem:[#allocation2 + $0x8] sm:$0xf]
    %v328 = vld [vmem:[#allocation2 + $0xc] sm:$0xf]
    %v329 = vld [vmem:[#allocation2 + $0x10] sm:$0xf]
    %v330 = vld [vmem:[#allocation2 + $0x14] sm:$0xf]
    %v331 = vld [vmem:[#allocation2 + $0x18] sm:$0xf]
    %v332 = vld [vmem:[#allocation2 + $0x1c] sm:$0xf]
    %v333 = vld [vmem:[#allocation2 + $0x20] sm:$0xf]
    %v334 = vld [vmem:[#allocation2 + $0x24] sm:$0xf]
    %v335 = vld [vmem:[#allocation2 + $0x28] sm:$0xf]
    %v336 = vld [vmem:[#allocation2 + $0x2c] sm:$0xf]
    %v337 = vld [vmem:[#allocation2 + $0x30] sm:$0xf]
    %v338 = vld [vmem:[#allocation2 + $0x34] sm:$0xf]
    %v339 = vld [vmem:[#allocation2 + $0x38] sm:$0xf]
    %v340 = vld [vmem:[#allocation2 + $0x3c] sm:$0xf]
    %v357 = vunpack.c.l.b16 %v325
    %v358 = vunpack.c.l.b16 %v326
    %v359 = vunpack.c.l.b16 %v327
    %v360 = vunpack.c.l.b16 %v328
    %v361 = vunpack.c.l.b16 %v329
    %v362 = vunpack.c.l.b16 %v330
    %v363 = vunpack.c.l.b16 %v331
    %v364 = vunpack.c.l.b16 %v332
    %v365 = vunpack.c.l.b16 %v333
    %v366 = vunpack.c.l.b16 %v334
    %v367 = vunpack.c.l.b16 %v335
    %v368 = vunpack.c.l.b16 %v336
    %v369 = vunpack.c.l.b16 %v337
    %v370 = vunpack.c.l.b16 %v338
    %v371 = vunpack.c.l.b16 %v339
    %v372 = vunpack.c.l.b16 %v340
    %v373 = vpack.c.b16 %v358, %v357
    %v374 = vpack.c.b16 %v360, %v359
    %v375 = vpack.c.b16 %v362, %v361
    %v376 = vpack.c.b16 %v364, %v363
    %v377 = vpack.c.b16 %v366, %v365
    %v378 = vpack.c.b16 %v368, %v367
    %v379 = vpack.c.b16 %v370, %v369
    %v380 = vpack.c.b16 %v372, %v371
    %389 = vmatpush.bf16.msra.mxu0 %v380
    %390 = vmatpush.bf16.msra.mxu0 %v379
    %391 = vmatpush.bf16.msra.mxu0 %v378
    %392 = vmatpush.bf16.msra.mxu0 %v377
    %393 = vmatpush.bf16.msra.mxu0 %v376
    %394 = vmatpush.bf16.msra.mxu0 %v375
    %395 = vmatpush.bf16.msra.mxu0 %v374
    %396 = vmatpush.bf16.msra.mxu0 %v373
    %397 = vmatmul.bf16.gmra.mxu0 %v317
    %v398 = vpop.f32.mrf.mxu0
    %v399 = vadd.f32 0.0, %v398
    %v400 = vpop.f32.mrf.mxu0
    %v401 = vadd.f32 0.0, %v400
    %402 = vmatmul.bf16.gmra.mxu0 %v318
    %v403 = vpop.f32.mrf.mxu0
    %v404 = vadd.f32 0.0, %v403
    %v405 = vpop.f32.mrf.mxu0
    %v406 = vadd.f32 0.0, %v405
    %407 = vmatmul.bf16.gmra.mxu0 %v319
    %v408 = vpop.f32.mrf.mxu0
    %v409 = vadd.f32 0.0, %v408
    %v410 = vpop.f32.mrf.mxu0
    %v411 = vadd.f32 0.0, %v410
    %412 = vmatmul.bf16.gmra.mxu0 %v320
    %v413 = vpop.f32.mrf.mxu0
    %v414 = vadd.f32 0.0, %v413
    %v415 = vpop.f32.mrf.mxu0
    %v416 = vadd.f32 0.0, %v415
    %417 = vmatmul.bf16.gmra.mxu0 %v321
    %v418 = vpop.f32.mrf.mxu0
    %v419 = vadd.f32 0.0, %v418
    %v420 = vpop.f32.mrf.mxu0
    %v421 = vadd.f32 0.0, %v420
    %422 = vmatmul.bf16.gmra.mxu0 %v322
    %v423 = vpop.f32.mrf.mxu0
    %v424 = vadd.f32 0.0, %v423
    %v425 = vpop.f32.mrf.mxu0
    %v426 = vadd.f32 0.0, %v425
    %427 = vmatmul.bf16.gmra.mxu0 %v323
    %v428 = vpop.f32.mrf.mxu0
    %v429 = vadd.f32 0.0, %v428
    %v430 = vpop.f32.mrf.mxu0
    %v431 = vadd.f32 0.0, %v430
    %432 = vmatmul.bf16.gmra.mxu0 %v324
    %v433 = vpop.f32.mrf.mxu0
    %v434 = vadd.f32 0.0, %v433
    %v435 = vpop.f32.mrf.mxu0
    %v436 = vadd.f32 0.0, %v435
    %437 = vdwg.mxu0
    %v438 = vpack.c.bf16 %v401, %v399
    %v439 = vpack.c.bf16 %v406, %v404
    %v440 = vpack.c.bf16 %v411, %v409
    %v441 = vpack.c.bf16 %v416, %v414
    %v442 = vpack.c.bf16 %v421, %v419
    %v443 = vpack.c.bf16 %v426, %v424
    %v444 = vpack.c.bf16 %v431, %v429
    %v445 = vpack.c.bf16 %v436, %v434
    %v446 = vld [vmem:[%s5] sm:$0x1]
    %v448 = vperm.slane %v446, 0
    %450 = vmatpush.bf16.msra.mxu0 %v445
    %451 = vmatpush.bf16.msra.mxu0 %v444
    %452 = vmatpush.bf16.msra.mxu0 %v443
    %453 = vmatpush.bf16.msra.mxu0 %v442
    %454 = vmatpush.bf16.msra.mxu0 %v441
    %455 = vmatpush.bf16.msra.mxu0 %v440
    %456 = vmatpush.bf16.msra.mxu0 %v439
    %457 = vmatpush.bf16.msra.mxu0 %v438
    %458 = vmatmul.bf16.gmra.mxu0 %v236
    %v459 = vpop.f32.mrf.mxu0
    %v460 = vadd.f32 %v448, %v459
    %v461 = vpop.f32.mrf.mxu0
    %v462 = vadd.f32 %v448, %v461
    %463 = vmatmul.bf16.gmra.mxu0 %v237
    %v464 = vpop.f32.mrf.mxu0
    %v465 = vadd.f32 %v448, %v464
    %v466 = vpop.f32.mrf.mxu0
    %v467 = vadd.f32 %v448, %v466
    %468 = vmatmul.bf16.gmra.mxu0 %v238
    %v469 = vpop.f32.mrf.mxu0
    %v470 = vadd.f32 %v448, %v469
    %v471 = vpop.f32.mrf.mxu0
    %v472 = vadd.f32 %v448, %v471
    %473 = vmatmul.bf16.gmra.mxu0 %v239
    %v474 = vpop.f32.mrf.mxu0
    %v475 = vadd.f32 %v448, %v474
    %v476 = vpop.f32.mrf.mxu0
    %v477 = vadd.f32 %v448, %v476
    %478 = vmatmul.bf16.gmra.mxu0 %v240
    %v479 = vpop.f32.mrf.mxu0
    %v480 = vadd.f32 %v448, %v479
    %v481 = vpop.f32.mrf.mxu0
    %v482 = vadd.f32 %v448, %v481
    %483 = vmatmul.bf16.gmra.mxu0 %v241
    %v484 = vpop.f32.mrf.mxu0
    %v485 = vadd.f32 %v448, %v484
    %v486 = vpop.f32.mrf.mxu0
    %v487 = vadd.f32 %v448, %v486
    %488 = vmatmul.bf16.gmra.mxu0 %v242
    %v489 = vpop.f32.mrf.mxu0
    %v490 = vadd.f32 %v448, %v489
    %v491 = vpop.f32.mrf.mxu0
    %v492 = vadd.f32 %v448, %v491
    %493 = vmatmul.bf16.gmra.mxu0 %v243
    %v494 = vpop.f32.mrf.mxu0
    %v495 = vadd.f32 %v448, %v494
    %v496 = vpop.f32.mrf.mxu0
    %v497 = vadd.f32 %v448, %v496
    %498 = vdwg.mxu0
    %499 = vst [vmem:[#allocation5] sm:$0xff] %v460
    %500 = vst [vmem:[#allocation5 + $0x8] sm:$0xff] %v462
    %501 = vst [vmem:[#allocation5 + $0x10] sm:$0xff] %v465
    %502 = vst [vmem:[#allocation5 + $0x18] sm:$0xff] %v467
    %503 = vst [vmem:[#allocation5 + $0x20] sm:$0xff] %v470
    %504 = vst [vmem:[#allocation5 + $0x28] sm:$0xff] %v472
    %505 = vst [vmem:[#allocation5 + $0x30] sm:$0xff] %v475
    %506 = vst [vmem:[#allocation5 + $0x38] sm:$0xff] %v477
    %507 = vst [vmem:[#allocation5 + $0x40] sm:$0xff] %v480
    %508 = vst [vmem:[#allocation5 + $0x48] sm:$0xff] %v482
    %509 = vst [vmem:[#allocation5 + $0x50] sm:$0xff] %v485
    %510 = vst [vmem:[#allocation5 + $0x58] sm:$0xff] %v487
    %511 = vst [vmem:[#allocation5 + $0x60] sm:$0xff] %v490
    %512 = vst [vmem:[#allocation5 + $0x68] sm:$0xff] %v492
    %513 = vst [vmem:[#allocation5 + $0x70] sm:$0xff] %v495
    %514 = vst [vmem:[#allocation5 + $0x78] sm:$0xff] %v497
    // Predicated region
    $region30: #{tpu_custom_call.1} parent=1 // pred_check
      _
    $region31: #{tpu_custom_call.1} parent=1 // pred_check_branch
      %516 = sbr.rel (0) target = $region33
    $region32: #{tpu_custom_call.1} parent=1 // pred_region
      %518 = vsyncadd [#allocation4], 0
      %s519 = sshll.u32 [#allocation5], 4
      %s520 = int_to_ptr.vmem [resolvable:$true] %s519
      %s521 = sshll.u32 %s6, 4
      %s522 = int_to_ptr.hbm [resolvable:$true] %s521
      %527 = dma.vmem_to_hbm [thread:$0]  %s520, 2048, %s522, [#allocation4], 128, 128, 8
    $region33: #{tpu_custom_call.1} parent=1 // pred_fallthru
      _
    // Predicated region
    $region34: #{tpu_custom_call.1} parent=1 // pred_check
      _
    $region35: #{tpu_custom_call.1} parent=1 // pred_check_branch
      %529 = sbr.rel (0) target = $region37
    $region36: #{tpu_custom_call.1} parent=1 // pred_region
      %531 = dma.done [#allocation4], 2048
    $region37: #{tpu_custom_call.1} parent=1 // pred_fallthru
      _
    %532 = vsyncpa [#allocation3], 1
    %533 = vsyncpa [#allocation4], 1

</llo_original>
